<compile_context>
chip_gen: v7x
topology: tpu7x:2x2x1
jax: 0.10.0
libtpu: 0.0.40
codegen_flags: <defaults>
</compile_context>

<pallas_src>
import jax
import jax.numpy as jnp
from jax.experimental import pallas as pl
from jax.experimental.pallas import tpu as pltpu


def _identity_kernel(x_ref, o_ref):
    # TODO(synk): the reference module performs no actual layer norm; if real
    # LN is ever intended, do the mean/var reduction over the last (lane) axis
    # here with keepdims + rsqrt (XLU/EUP slots) at this same tiling.
    o_ref[...] = x_ref[...]


_LANE_CANDIDATES = (4096, 2048, 1024, 512, 256, 128)
_TARGET_BLOCK_BYTES = 2 * 1024 * 1024  # ~2 MiB per block


def simple_layer_norm(x, normalized_shape=None, eps=1e-5):
    """Pallas implementation of SimpleLayerNorm.forward (identity)."""
    del normalized_shape, eps  # unused by the reference forward

    orig_shape = x.shape
    n = x.size
    itemsize = jnp.dtype(x.dtype).itemsize

    # (b) Lane-dense layout: biggest 128-multiple lane width that divides n.
    lane = next((c for c in _LANE_CANDIDATES if n % c == 0), None)
    if lane is None:
        # Fallback for awkward sizes: keep the trailing dim as the lane dim
        # (a full-extent block on the lane axis is always legal).
        lane = orig_shape[-1] if len(orig_shape) else max(n, 1)
    rows = n // lane
    x2d = x.reshape(rows, lane)

    # (c) Row tile sized for ~_TARGET_BLOCK_BYTES; multiple of 8 sublanes
    # unless it spans the full row extent.
    rows_tile = min(rows, max(8, _TARGET_BLOCK_BYTES // (lane * itemsize)))
    if rows_tile != rows:
        rows_tile = max(8, (rows_tile // 8) * 8)
    grid = (pl.cdiv(rows, rows_tile),)

    # Explicit VMEM budget: 2 buffers x (in + out) x block + headroom, clamped
    # so it is safe on v5e/v6e (128 MiB) and v7x (64 MiB physical).
    block_bytes = rows_tile * lane * itemsize
    vmem_limit = int(min(max(4 * block_bytes + (2 << 20), 16 << 20), 48 << 20))

    y2d = pl.pallas_call(
        _identity_kernel,
        out_shape=jax.ShapeDtypeStruct(x2d.shape, x2d.dtype),
        grid_spec=pltpu.PrefetchScalarGridSpec(
            num_scalar_prefetch=0,
            grid=grid,
            in_specs=[pl.BlockSpec((rows_tile, lane), lambda i: (i, 0))],
            out_specs=pl.BlockSpec((rows_tile, lane), lambda i: (i, 0)),
        ),
        # (a) Output aliases the input buffer: identity needs no extra HBM
        # buffer when the input value is dead after this op.
        input_output_aliases={0: 0},
        compiler_params=pltpu.CompilerParams(
            dimension_semantics=("parallel",),
            vmem_limit_bytes=vmem_limit,
        ),
    )(x2d)

    return y2d.reshape(orig_shape)


if __name__ == "__main__":
    key = jax.random.PRNGKey(0)
    batch, seq, hidden = 2, 8, 32  # normalized_shape = hidden = 32
    x = jax.random.normal(key, (batch, seq, hidden), dtype=jnp.float32)
    # Independent reference value (same key -> deterministic), so the check is
    # valid even if the runtime reuses x's buffer for the aliased output.
    expected = jax.random.normal(key, (batch, seq, hidden), dtype=jnp.float32)

    y = simple_layer_norm(x, normalized_shape=hidden)
    y = jax.block_until_ready(y)

    assert y.shape == expected.shape and y.dtype == expected.dtype
    assert bool(jnp.array_equal(y, expected))
    print("KERNEL_OK")
</pallas_src>

<mosaic_0001>
module attributes {stable_mosaic.version = 11 : i64} {
  func.func @_identity_kernel(%arg0: i32, %arg1: memref<1x512xf32, #tpu.memory_space<vmem>>, %arg2: memref<1x512xf32, #tpu.memory_space<vmem>>) attributes {dimension_semantics = [#tpu.dimension_semantics<parallel>], iteration_bounds = array<i64: 1>, scalar_prefetch = 0 : i64, scratch_operands = 0 : i64, tpu.core_type = #tpu.core_type<tc>, window_params = [{transform_indices = @transform_0, window_bounds = array<i64: 1, 512>}, {transform_indices = @transform_1, window_bounds = array<i64: 1, 512>}]} {
    %c0 = arith.constant 0 : index
    %c0_0 = arith.constant 0 : index
    %0 = vector.load %arg1[%c0, %c0_0] : memref<1x512xf32, #tpu.memory_space<vmem>>, vector<1x512xf32>
    %c0_1 = arith.constant 0 : index
    %c0_2 = arith.constant 0 : index
    %1 = vector.load %arg2[%c0_1, %c0_2] : memref<1x512xf32, #tpu.memory_space<vmem>>, vector<1x512xf32>
    tpu.vector_store %arg2[%c0_1, %c0_2], %0 {strides = array<i32>} : memref<1x512xf32, #tpu.memory_space<vmem>>, vector<1x512xf32>,
    return
  }
  func.func @transform_0(%arg0: i32) -> (i32, i32) {
    %c0_i32 = arith.constant 0 : i32
    %c0_i32_0 = arith.constant 0 : i32
    return %arg0, %c0_i32 : i32, i32
  }
  func.func @transform_1(%arg0: i32) -> (i32, i32) {
    %c0_i32 = arith.constant 0 : i32
    %c0_i32_0 = arith.constant 0 : i32
    return %arg0, %c0_i32 : i32, i32
  }
}

</mosaic_0001>

<llo_original>
// kernel: tpu_custom_call.1
$region0: #{tpu_custom_call.1}
  #allocation0 [shape = 'u32[]', space=smem, size = 0x4, offset = 0x4, fixed_abs, tag = 'smem constant byte address 0x4 - core index']
  #allocation1 [shape = 'u32[144,128]{1,0:T(1,128)}', space=vmem, size = 0x12000, scoped, tag = 'internal scratch']
  %s0 = inlined_call_operand.hbm [shape: f32[1,512], index: 0, kind: input, shape index: {}, may-alias: {0,1}]
  %s1 = inlined_call_operand.hbm [shape: f32[1,512], index: 1, kind: output, shape index: {}, may-alias: {0,1}]
  %s2 = sld [smem:[#allocation0]]
  $region18: #{tpu_custom_call.1} parent=0
    _
  %s4 = ssub.s32 1, %s2
  %s5 = scalar_select 0, %s4, %s2
  $region1: #{tpu_custom_call.1} parent=0
    #allocation2 [shape = 'u8[2048]{0}', space=vmem, size = 0x800, scoped, tag = 'input window, operand 0, single buffered']
    #allocation3 [shape = 's32[1]{0}', space=sflag, size = 0x4, scoped, tag = 'scoped memory for tpu_custom_call.1']
    #allocation4 [shape = 's32[1]{0}', space=sflag, size = 0x4, scoped, tag = 'scoped memory for tpu_custom_call.1']
    #allocation5 [shape = 'u8[2048]{0}', space=vmem, size = 0x800, scoped, tag = 'output window, operand 0, single buffered']
    %6 = vsyncpa [#allocation3], 0
    %7 = vsyncpa [#allocation4], 0
    // Predicated region
    $region2: #{tpu_custom_call.1} parent=1 // pred_check
      _
    $region3: #{tpu_custom_call.1} parent=1 // pred_check_branch
      %9 = sbr.rel (0) target = $region5
    $region4: #{tpu_custom_call.1} parent=1 // pred_region
      %s11 = ssub.s32 64, 64
      %12 = vsyncadd [#allocation3], %s11
      %s14 = sshll.u32 [#allocation2], 4
      %s15 = int_to_ptr.vmem [resolvable:$true] %s14
      %17 = dma.hbm_to_vmem [thread:$0]  %s0, 64, %s15, [#allocation3]
    $region5: #{tpu_custom_call.1} parent=1 // pred_fallthru
      _
    // Predicated region
    $region6: #{tpu_custom_call.1} parent=1 // pred_check
      _
    $region7: #{tpu_custom_call.1} parent=1 // pred_check_branch
      %19 = sbr.rel (0) target = $region9
    $region8: #{tpu_custom_call.1} parent=1 // pred_region
      %20 = dma.done [#allocation3], 64
    $region9: #{tpu_custom_call.1} parent=1 // pred_fallthru
      _
    %v21 = vld [vmem:[#allocation2] sm:$0xf]
    %v22 = vlaneseq
    %vm23 = vcmp.ge.s32.totalorder %v22, 0
    %vm24 = vcmp.lt.s32.totalorder %v22, 512
    %vm25 = vmand %vm23, %vm24
    %26 = vst.msk [vmem:[#allocation5] sm:$0xf] %vm25, %v21
    // Predicated region
    $region10: #{tpu_custom_call.1} parent=1 // pred_check
      _
    $region11: #{tpu_custom_call.1} parent=1 // pred_check_branch
      %28 = sbr.rel (0) target = $region13
    $region12: #{tpu_custom_call.1} parent=1 // pred_region
      %s30 = ssub.s32 64, 64
      %31 = vsyncadd [#allocation4], %s30
      %s33 = sshll.u32 [#allocation5], 4
      %s34 = int_to_ptr.vmem [resolvable:$true] %s33
      %36 = dma.vmem_to_hbm [thread:$0]  %s34, 64, %s1, [#allocation4]
    $region13: #{tpu_custom_call.1} parent=1 // pred_fallthru
      _
    // Predicated region
    $region14: #{tpu_custom_call.1} parent=1 // pred_check
      _
    $region15: #{tpu_custom_call.1} parent=1 // pred_check_branch
      %38 = sbr.rel (0) target = $region17
    $region16: #{tpu_custom_call.1} parent=1 // pred_region
      %39 = dma.done [#allocation4], 64
    $region17: #{tpu_custom_call.1} parent=1 // pred_fallthru
      _
    %40 = vsyncpa [#allocation3], 1
    %41 = vsyncpa [#allocation4], 1

</llo_original>
